<compile_context>
chip_gen: v5e
topology: v5e:2x2
jax: 0.10.0
libtpu: 0.0.40
codegen_flags: <defaults>
</compile_context>

<pallas_src>
import functools

import jax
import jax.numpy as jnp
from jax.experimental import pallas as pl
from jax.experimental.pallas import tpu as pltpu

_COLS = 512  # lane-dense tile width (multiple of 128)


def relu_kernel(x_ref, o_ref):
    # Elementwise ReLU on the current tile (VPU). Scalar 0 avoids a
    # materialized zeros temporary and preserves the input dtype.
    o_ref[...] = jnp.maximum(x_ref[...], 0)


def _round_up(x: int, m: int) -> int:
    return ((x + m - 1) // m) * m


@functools.lru_cache(maxsize=None)
def _tile_budget():
    """(max_block_rows, vmem_limit_bytes) chosen per TPU generation."""
    try:
        vmem = pltpu.get_tpu_info().vmem_capacity_bytes
    except Exception:
        # Unknown / non-TPU trace environment: 2 MiB f32 tile, ~8 MiB
        # double-buffered, fits every scoped-VMEM default (incl. v5e 16 MiB).
        return 1024, None
    if vmem >= 100 * 1024 * 1024:
        # v5e / v6e class (128 MiB physical VMEM): 4 MiB tile, 16 MiB
        # double-buffered in+out, explicit 32 MiB scoped limit for headroom.
        return 2048, 32 << 20
    if vmem >= 48 * 1024 * 1024:
        # v7x class (64 MiB physical VMEM): 8 MiB tile, 32 MiB double-buffered,
        # 40 MiB scoped limit (still well under physical).
        return 4096, 40 << 20
    return 1024, None


def _block_rows_and_grid(rows: int, itemsize: int, max_rows: int):
    # Dtype-native sublane multiple: 8 (f32), 16 (bf16/f16), 32 (int8/fp8).
    sub = max(8, 32 // itemsize)
    if rows > max_rows:
        block_rows = max_rows  # multiple of 32 -> dense layout for any dtype
    elif rows >= 2 * sub:
        # Split into >=2 tiles so the pipeline double-buffers and the row axis
        # can shard across both TensorCores on v7x.
        block_rows = min(max_rows, _round_up(pl.cdiv(rows, 2), sub))
    else:
        block_rows = rows  # tiny input: single full-extent block (always legal)
    return block_rows, pl.cdiv(rows, block_rows)


def _relu_slab(slab, block_rows, grid_rows, vmem_limit, fuse_input):
    return pl.pallas_call(
        relu_kernel,
        out_shape=jax.ShapeDtypeStruct(slab.shape, slab.dtype),
        grid=(grid_rows,),
        in_specs=[pl.BlockSpec((block_rows, _COLS), lambda i: (i, 0))],
        out_specs=pl.BlockSpec((block_rows, _COLS), lambda i: (i, 0)),
        compiler_params=pltpu.CompilerParams(
            dimension_semantics=("parallel",),
            vmem_limit_bytes=vmem_limit,
            allow_input_fusion=[bool(fuse_input)],
        ),
    )(slab)


@jax.jit
def yinkang_forward(x: jax.Array) -> jax.Array:
    """ReLU(x) = max(x, 0) via a tiled, pipelined Pallas kernel (any shape)."""
    orig_shape = x.shape
    n = x.size
    if n == 0:
        return x

    max_rows, vmem_limit = _tile_budget()
    itemsize = jnp.dtype(x.dtype).itemsize

    if n % _COLS == 0:
        # Fast path: pure metadata reshapes around the kernel -> exactly one
        # HBM read and one HBM write (the 2N roofline floor).
        rows = n // _COLS
        block_rows, grid_rows = _block_rows_and_grid(rows, itemsize, max_rows)
        slab = x.reshape(rows, _COLS)
        out = _relu_slab(slab, block_rows, grid_rows, vmem_limit, fuse_input=False)
        return out.reshape(orig_shape)

    # Unaligned fallback: pad only the ragged tail up to the next multiple of
    # _COLS (ReLU(0) = 0, so zero padding is safe), let XLA fuse the pad into
    # the pallas_call input, mask the trailing partial row-block via the cdiv
    # grid, and slice the tail off once at the end.
    # TODO(synk): for production, fuse this ReLU into the producer/consumer
    # kernel's epilogue (or donate + alias the buffer via input_output_aliases)
    # to beat even the standalone 2N-byte HBM floor and drop this tail slice.
    rows = pl.cdiv(n, _COLS)
    padded_n = rows * _COLS
    block_rows, grid_rows = _block_rows_and_grid(rows, itemsize, max_rows)
    slab = jnp.pad(x.reshape(-1), (0, padded_n - n)).reshape(rows, _COLS)
    out = _relu_slab(slab, block_rows, grid_rows, vmem_limit, fuse_input=True)
    return out.reshape(-1)[:n].reshape(orig_shape)


if __name__ == "__main__":
    # Exact example tensor from the module's source (exercises the unaligned
    # fallback path) plus a larger NCHW-style tensor (exercises the aligned
    # fast path: 2*4*16*16 = 2048 = 4 * 512).
    x_small = jnp.array([[1.0, -0.5], [-1.0, 3.0]], dtype=jnp.float32)
    key = jax.random.PRNGKey(0)
    x_big = jax.random.normal(key, (2, 4, 16, 16), dtype=jnp.float32)

    out_small = jax.block_until_ready(yinkang_forward(x_small))
    out_big = jax.block_until_ready(yinkang_forward(x_big))

    # Correctness checks against the plain-JAX reference.
    assert out_small.shape == x_small.shape and out_small.dtype == x_small.dtype
    assert out_big.shape == x_big.shape and out_big.dtype == x_big.dtype
    assert jnp.allclose(out_small, jnp.maximum(x_small, 0.0))
    assert jnp.allclose(out_big, jnp.maximum(x_big, 0.0))

    print("KERNEL_OK")
</pallas_src>

<mosaic_0001>
module attributes {stable_mosaic.version = 11 : i64} {
  func.func @relu_kernel(%arg0: i32, %arg1: memref<1x512xf32, #tpu.memory_space<vmem>>, %arg2: memref<1x512xf32, #tpu.memory_space<vmem>>) attributes {dimension_semantics = [#tpu.dimension_semantics<parallel>], iteration_bounds = array<i64: 1>, scalar_prefetch = 0 : i64, scratch_operands = 0 : i64, tpu.core_type = #tpu.core_type<tc>, window_params = [{transform_indices = @transform_0, window_bounds = array<i64: 1, 512>}, {transform_indices = @transform_1, window_bounds = array<i64: 1, 512>}]} {
    %c0 = arith.constant 0 : index
    %c0_0 = arith.constant 0 : index
    %0 = vector.load %arg1[%c0, %c0_0] : memref<1x512xf32, #tpu.memory_space<vmem>>, vector<1x512xf32>
    %cst = arith.constant 0.000000e+00 : f32
    %1 = vector.broadcast %cst : f32 to vector<1x512xf32>
    %2 = arith.maximumf %0, %1 : vector<1x512xf32>
    %c0_1 = arith.constant 0 : index
    %c0_2 = arith.constant 0 : index
    %3 = vector.load %arg2[%c0_1, %c0_2] : memref<1x512xf32, #tpu.memory_space<vmem>>, vector<1x512xf32>
    tpu.vector_store %arg2[%c0_1, %c0_2], %2 {strides = array<i32>} : memref<1x512xf32, #tpu.memory_space<vmem>>, vector<1x512xf32>,
    return
  }
  func.func @transform_0(%arg0: i32) -> (i32, i32) {
    %c0_i32 = arith.constant 0 : i32
    %c0_i32_0 = arith.constant 0 : i32
    return %arg0, %c0_i32 : i32, i32
  }
  func.func @transform_1(%arg0: i32) -> (i32, i32) {
    %c0_i32 = arith.constant 0 : i32
    %c0_i32_0 = arith.constant 0 : i32
    return %arg0, %c0_i32 : i32, i32
  }
}

</mosaic_0001>

<llo_original>
// kernel: yinkang_forward.1
$region0: #{yinkang_forward.1}
  #allocation0 [shape = 'u32[]', space=smem, size = 0x4, offset = 0x4, fixed_abs, tag = 'smem constant byte address 0x4 - core index']
  #allocation1 [shape = 'u32[72,128]{1,0:T(1,128)}', space=vmem, size = 0x9000, scoped, tag = 'internal scratch']
  %s0 = inlined_call_operand.vmem [shape: f32[1,512], index: 0, kind: input, shape index: {}]
  %s1 = inlined_call_operand.vmem [shape: f32[1,512], index: 1, kind: output, shape index: {}]
  %s2 = sld [smem:[#allocation0]]
  $region14: #{yinkang_forward.1} parent=0
    _
  %s4 = ssub.s32 1, %s2
  %s5 = scalar_select 0, %s4, %s2
  // Predicated region
  $region2: #{yinkang_forward.1} parent=0 // pred_check
    _
  $region3: #{yinkang_forward.1} parent=0 // pred_check_branch
    %7 = sbr.rel (0) target = $region5
  $region4: #{yinkang_forward.1} parent=0 // pred_region
    _
  $region5: #{yinkang_forward.1} parent=0 // pred_fallthru
    _
  %v8 = vld [vmem:[%s0] sm:$0xf]
  %v9 = vmax.f32 %v8, 0.0
  %v10 = vlaneseq
  %vm11 = vcmp.ge.s32.totalorder %v10, 0
  %vm12 = vcmp.lt.s32.totalorder %v10, 512
  %vm13 = vmand %vm11, %vm12
  %14 = vst.msk [vmem:[%s1] sm:$0xf] %vm13, %v9
  // Predicated region
  $region6: #{yinkang_forward.1} parent=0 // pred_check
    _
  $region7: #{yinkang_forward.1} parent=0 // pred_check_branch
    %16 = sbr.rel (0) target = $region9
  $region8: #{yinkang_forward.1} parent=0 // pred_region
    _
  $region9: #{yinkang_forward.1} parent=0 // pred_fallthru
    _
  // Predicated region
  $region10: #{yinkang_forward.1} parent=0 // pred_check
    _
  $region11: #{yinkang_forward.1} parent=0 // pred_check_branch
    %18 = sbr.rel (0) target = $region13
  $region12: #{yinkang_forward.1} parent=0 // pred_region
    _
  $region13: #{yinkang_forward.1} parent=0 // pred_fallthru
    _

</llo_original>
